<compile_context>
chip_gen: v7x
topology: tpu7x:2x2x1
jax: 0.10.0
libtpu: 0.0.40
codegen_flags: <defaults>
</compile_context>

<pallas_src>
import inspect
import math

import jax
import jax.numpy as jnp
from jax.experimental import pallas as pl
from jax.experimental.pallas import tpu as pltpu

# 64 MiB is safe on every generation (v7x physical VMEM = 64 MiB); on
# v5e / v6e (128 MiB physical) this could be raised further toward ~100 MiB.
_VMEM_LIMIT = 64 * 1024 * 1024


def _supports_pipeline_mode():
    if not hasattr(pl, "Buffered"):
        return False
    try:
        return "pipeline_mode" in inspect.signature(pl.BlockSpec).parameters
    except (TypeError, ValueError):
        return False


_HAS_PIPELINE_MODE = _supports_pipeline_mode()


def _spec(block_shape, index_map, *, resident=False):
    """BlockSpec helper.  resident=True => block index never changes, so it is
    fetched once and single-buffered (no useless double-buffer VMEM)."""
    if resident and _HAS_PIPELINE_MODE:
        return pl.BlockSpec(block_shape, index_map, pipeline_mode=pl.Buffered(1))
    return pl.BlockSpec(block_shape, index_map)


def _round_up(x, m):
    return (x + m - 1) // m * m


def _pick_tile(n, candidates):
    for c in candidates:
        if n >= c and n % c == 0:
            return c
    return n


# ---------------------------------------------------------------------------
# Kernel 1: linear projection  y = x @ W + b   (bf16 MXU inputs, f32 acc)
# ---------------------------------------------------------------------------
def _linear_kernel(x_ref, w_ref, b_ref, o_ref):
    x = x_ref[...].astype(jnp.bfloat16)
    acc = jnp.dot(x, w_ref[...], preferred_element_type=jnp.float32)
    o_ref[...] = (acc + b_ref[...]).astype(o_ref.dtype)


def _linear(x2, w, b):
    """x2: (M, Din), w: (Din, Dout) bf16, b: (1, Dout) f32 -> (M, Dout) bf16."""
    m, d_in = x2.shape
    d_out = w.shape[1]

    # Row tile: 8-aligned; pad awkward M instead of one giant un-pipelined block.
    if m >= 128:
        tm = _pick_tile(m, (512, 256, 128))
        if tm == m and m > 512:
            tm = 256
    else:
        tm = _round_up(m, 8)
    m_pad = _round_up(m, tm)
    x_p = jnp.pad(x2, ((0, m_pad - m), (0, 0))) if m_pad != m else x2

    # Output-column tile keeps the resident weight slice bounded (v7x VMEM).
    # TODO(synk): also tile the contraction (Din) for very large models.
    tn = _pick_tile(d_out, (1024, 512, 256, 128))
    n_tiles = d_out // tn
    w_resident = n_tiles == 1   # constant block index -> single-buffer it

    cost = pl.CostEstimate(
        flops=2 * m_pad * d_in * d_out,
        transcendentals=0,
        bytes_accessed=int(m_pad * d_in * x_p.dtype.itemsize + d_in * d_out * 2
                           + d_out * 4 + m_pad * d_out * 2),
    )
    out = pl.pallas_call(
        _linear_kernel,
        out_shape=jax.ShapeDtypeStruct((m_pad, d_out), jnp.bfloat16),
        grid_spec=pltpu.PrefetchScalarGridSpec(
            num_scalar_prefetch=0,
            grid=(m_pad // tm, n_tiles),
            in_specs=[
                pl.BlockSpec((tm, d_in), lambda i, j: (i, 0)),
                _spec((d_in, tn), lambda i, j: (0, j), resident=w_resident),
                _spec((1, tn), lambda i, j: (0, j), resident=w_resident),
            ],
            out_specs=pl.BlockSpec((tm, tn), lambda i, j: (i, j)),
        ),
        compiler_params=pltpu.CompilerParams(
            dimension_semantics=("parallel", "parallel"),
            vmem_limit_bytes=_VMEM_LIMIT),
        cost_estimate=cost,
    )(x_p, w, b)
    return out[:m] if m_pad != m else out


# ---------------------------------------------------------------------------
# Kernel 2: grouped-head scaled-dot-product attention + fused combine / W_o
# grid = (batch, q_tile, head_group); head_group is the reduction axis that
# accumulates attn_h @ W_o[h] into a f32 VMEM scratch.  W_o / b_o stay
# resident in VMEM (constant block index, single-buffered).
# ---------------------------------------------------------------------------
def _attn_kernel(q_ref, k_ref, v_ref, wo_ref, bo_ref, o_ref, acc_ref):
    hg = pl.program_id(2)
    n_groups = pl.num_programs(2)
    group = q_ref.shape[1]

    @pl.when(hg == 0)
    def _():
        acc_ref[...] = jnp.zeros_like(acc_ref) + bo_ref[...]

    # 1/sqrt(d_k) is already folded into W_q/b_q -> no per-step q scaling.
    q = q_ref[0]                       # (G, tq,  dk) bf16
    k = k_ref[0]                       # (G, Skv, dk) bf16
    v = v_ref[0]                       # (G, Skv, dk) bf16

    # Batched scores over the head group (keeps the MXU pipeline full).
    s = jnp.einsum("gqd,gkd->gqk", q, k,
                   preferred_element_type=jnp.float32)          # (G, tq, Skv) f32
    # TODO(synk): optional attention mask (masked_fill) path not wired in.
    row_max = jnp.max(s, axis=-1, keepdims=True)                # f32
    e = jnp.exp((s - row_max).astype(jnp.bfloat16))             # bf16 EUP exp
    denom = jnp.sum(e.astype(jnp.float32), axis=-1, keepdims=True)
    p = e * pl.reciprocal(denom, approx=True).astype(jnp.bfloat16)   # bf16 probs

    attn = jnp.einsum("gqk,gkd->gqd", p, v,
                      preferred_element_type=jnp.float32)       # (G, tq, dk) f32

    # Fused head-combine + output projection: out += sum_g attn_g @ W_o[head_g].
    # TODO(synk): concatenate heads along lanes to widen the W_o contraction
    # to G*dk (or unfuse into a standalone K=D matmul) if this becomes MXU-bound.
    contrib = None
    for gi in range(group):
        part = jnp.dot(attn[gi].astype(jnp.bfloat16), wo_ref[hg * group + gi],
                       preferred_element_type=jnp.float32)
        contrib = part if contrib is None else contrib + part
    acc_ref[...] += contrib

    @pl.when(hg == n_groups - 1)
    def _():
        o_ref[0] = acc_ref[...].astype(o_ref.dtype)


def _attention(q_h, k_h, v_h, wo_h, bo, out_dtype, group):
    """q_h: (B,H,Sq,dk); k_h/v_h: (B,H,Skv,dk) bf16; wo_h: (H,dk,D) bf16; bo: (1,D)."""
    b, h, s_q, dk = q_h.shape
    s_kv = k_h.shape[2]
    d = wo_h.shape[-1]
    n_groups = h // group
    tq = _pick_tile(s_q, (512, 256, 128))
    n_q = s_q // tq

    q_spec = pl.BlockSpec((1, group, tq, dk), lambda bi, qi, hg: (bi, hg, qi, 0))
    kv_spec = pl.BlockSpec((1, group, s_kv, dk), lambda bi, qi, hg: (bi, hg, 0, 0))
    wo_spec = _spec((h, dk, d), lambda bi, qi, hg: (0, 0, 0), resident=True)
    bo_spec = _spec((1, d), lambda bi, qi, hg: (0, 0), resident=True)
    out_spec = pl.BlockSpec((1, tq, d), lambda bi, qi, hg: (bi, qi, 0))

    cost = pl.CostEstimate(
        flops=int(b * h * (4 * s_q * s_kv * dk + 2 * s_q * dk * d)),
        transcendentals=int(b * h * s_q * s_kv),
        bytes_accessed=int(q_h.size * 2 + k_h.size * 2 + v_h.size * 2
                           + wo_h.size * 2 + bo.size * 4
                           + b * s_q * d * jnp.dtype(out_dtype).itemsize),
    )
    # TODO(synk): for very long S_kv add flash-style K/V tiling (online softmax)
    # so the (tq, S_kv) score tile stays bounded within v7x's 64 MiB VMEM.
    return pl.pallas_call(
        _attn_kernel,
        out_shape=jax.ShapeDtypeStruct((b, s_q, d), out_dtype),
        grid_spec=pltpu.PrefetchScalarGridSpec(
            num_scalar_prefetch=0,
            grid=(b, n_q, n_groups),
            in_specs=[q_spec, kv_spec, kv_spec, wo_spec, bo_spec],
            out_specs=out_spec,
            scratch_shapes=[pltpu.VMEM((tq, d), jnp.float32)],
        ),
        compiler_params=pltpu.CompilerParams(
            dimension_semantics=("parallel", "parallel", "arbitrary"),
            vmem_limit_bytes=_VMEM_LIMIT),
        cost_estimate=cost,
    )(q_h, k_h, v_h, wo_h, bo)


# ---------------------------------------------------------------------------
# Wrapper mirroring MultiHeadAttention.forward(Q, K, V, mask=None)
# ---------------------------------------------------------------------------
def _split_heads(x, num_heads):
    """(B, S, D) -> (B, H, S, d_k): XLA layout glue outside the kernels."""
    b, s, d = x.shape
    dk = d // num_heads
    # TODO(synk): when d_k % 128 == 0 this transpose can be skipped by reading
    # (1, S, D) blocks and slicing heads on the lane axis inside the kernel.
    return x.reshape(b, s, num_heads, dk).transpose(0, 2, 1, 3)


def _pick_head_group(num_heads, d_k):
    """Largest divisor of num_heads with group*d_k <= 256 (capped at 8)."""
    cap = max(1, min(8, 256 // d_k))
    group = 1
    for cand in range(1, num_heads + 1):
        if num_heads % cand == 0 and cand <= cap:
            group = cand
    return group


def multi_head_attention(Q, K, V, params, num_heads, mask=None):
    """Q: (B, Sq, D); K, V: (B, Skv, D).  params: dict of (D,D) weights / (1,D) biases."""
    if mask is not None:
        # TODO(synk): attention mask (masked_fill) path not implemented.
        raise NotImplementedError("mask is not supported by the Pallas kernels yet")

    b, s_q, d = Q.shape
    s_kv = K.shape[1]
    d_k = d // num_heads
    bf = jnp.bfloat16
    scale = 1.0 / math.sqrt(d_k)

    # Fold the 1/sqrt(d_k) softmax scale into W_q / b_q (host-side, one-time).
    wq = (params["wq"] * scale).astype(bf)
    bq = params["bq"] * scale
    wk = params["wk"].astype(bf)
    wv = params["wv"].astype(bf)
    wo = params["wo"].astype(bf)
    bk, bv, bo = params["bk"], params["bv"], params["bo"]

    if (Q is K) and (K is V):
        # Self-attention fast path: one fused (D, 3D) projection matmul.
        w_qkv = jnp.concatenate([wq, wk, wv], axis=1)          # (D, 3D) bf16
        b_qkv = jnp.concatenate([bq, bk, bv], axis=1)          # (1, 3D) f32
        qkv = _linear(Q.reshape(b * s_q, d), w_qkv, b_qkv)     # (B*S, 3D) bf16
        qp = qkv[:, :d].reshape(b, s_q, d)
        kp = qkv[:, d:2 * d].reshape(b, s_q, d)
        vp = qkv[:, 2 * d:].reshape(b, s_q, d)
    else:
        # Cross-attention: Q and K/V may have different sequence lengths.
        qp = _linear(Q.reshape(b * s_q, d), wq, bq).reshape(b, s_q, d)
        kp = _linear(K.reshape(b * s_kv, d), wk, bk).reshape(b, s_kv, d)
        vp = _linear(V.reshape(b * s_kv, d), wv, bv).reshape(b, s_kv, d)

    q_h = _split_heads(qp, num_heads)       # (B, H, Sq,  dk) bf16
    k_h = _split_heads(kp, num_heads)       # (B, H, Skv, dk) bf16
    v_h = _split_heads(vp, num_heads)
    wo_h = wo.reshape(num_heads, d_k, d)    # W_o rows are head-major

    group = _pick_head_group(num_heads, d_k)
    return _attention(q_h, k_h, v_h, wo_h, bo, out_dtype=Q.dtype, group=group)


# ---------------------------------------------------------------------------
# Pure-JAX reference mirroring the PyTorch module (f32 everywhere).
# ---------------------------------------------------------------------------
def _reference_mha(Q, K, V, params, num_heads):
    b, s_q, d = Q.shape
    d_k = d // num_heads

    def lin(x, w, bias):
        return x @ w + bias[0]

    def split(x):
        bs, ss, _ = x.shape
        return x.reshape(bs, ss, num_heads, d_k).transpose(0, 2, 1, 3)

    qh = split(lin(Q, params["wq"], params["bq"]))
    kh = split(lin(K, params["wk"], params["bk"]))
    vh = split(lin(V, params["wv"], params["bv"]))

    scores = jnp.einsum("bhqd,bhkd->bhqk", qh, kh) / math.sqrt(d_k)
    probs = jax.nn.softmax(scores, axis=-1)
    attn = jnp.einsum("bhqk,bhkd->bhqd", probs, vh)
    combined = attn.transpose(0, 2, 1, 3).reshape(b, s_q, d)
    return lin(combined, params["wo"], params["bo"])


if __name__ == "__main__":
    B, S, D, H = 2, 8, 32, 4          # batch, seq, d_model, num_heads
    S_KV = 16                         # cross-attention source length (!= S)

    key = jax.random.PRNGKey(0)
    keys = jax.random.split(key, 12)

    bound = 1.0 / math.sqrt(D)        # PyTorch nn.Linear default init range

    def u(k, shape):
        return jax.random.uniform(k, shape, jnp.float32, -bound, bound)

    params = {
        "wq": u(keys[0], (D, D)), "bq": u(keys[1], (1, D)),
        "wk": u(keys[2], (D, D)), "bk": u(keys[3], (1, D)),
        "wv": u(keys[4], (D, D)), "bv": u(keys[5], (1, D)),
        "wo": u(keys[6], (D, D)), "bo": u(keys[7], (1, D)),
    }

    # Self-attention (fused-QKV fast path).
    X = jax.random.normal(keys[8], (B, S, D), jnp.float32)
    out_self = jax.block_until_ready(multi_head_attention(X, X, X, params, H))
    ref_self = _reference_mha(X, X, X, params, H)
    assert out_self.shape == (B, S, D)
    # bf16 MXU inputs / bf16 probabilities (f32 acc) -> loosened tolerance.
    assert jnp.allclose(out_self, ref_self, atol=3e-2, rtol=3e-2), "self-attn mismatch"

    # Cross-attention with a different source sequence length (S_q != S_kv).
    Q = jax.random.normal(keys[9], (B, S, D), jnp.float32)
    K = jax.random.normal(keys[10], (B, S_KV, D), jnp.float32)
    V = jax.random.normal(keys[11], (B, S_KV, D), jnp.float32)
    out_x = jax.block_until_ready(multi_head_attention(Q, K, V, params, H))
    ref_x = _reference_mha(Q, K, V, params, H)
    assert out_x.shape == (B, S, D)
    assert jnp.allclose(out_x, ref_x, atol=3e-2, rtol=3e-2), "cross-attn mismatch"

    print("KERNEL_OK")
</pallas_src>

<mosaic_0001>
module attributes {stable_mosaic.version = 11 : i64} {
  func.func @_linear_kernel(%arg0: i32, %arg1: i32, %arg2: memref<16x32xf32, #tpu.memory_space<vmem>>, %arg3: memref<32x96xbf16, #tpu.memory_space<vmem>>, %arg4: memref<1x96xf32, #tpu.memory_space<vmem>>, %arg5: memref<16x96xbf16, #tpu.memory_space<vmem>>) attributes {dimension_semantics = [#tpu.dimension_semantics<parallel>, #tpu.dimension_semantics<parallel>], iteration_bounds = array<i64: 1, 1>, scalar_prefetch = 0 : i64, scratch_operands = 0 : i64, tpu.core_type = #tpu.core_type<tc>, window_params = [{transform_indices = @transform_0, window_bounds = array<i64: 16, 32>}, {pipeline_mode = #tpu.pipeline_mode<synchronous>, transform_indices = @transform_1, window_bounds = array<i64: 32, 96>}, {pipeline_mode = #tpu.pipeline_mode<synchronous>, transform_indices = @transform_2, window_bounds = array<i64: 1, 96>}, {transform_indices = @transform_3, window_bounds = array<i64: 16, 96>}]} {
    %c0 = arith.constant 0 : index
    %c0_0 = arith.constant 0 : index
    %0 = vector.load %arg2[%c0, %c0_0] : memref<16x32xf32, #tpu.memory_space<vmem>>, vector<16x32xf32>
    %1 = arith.truncf %0 : vector<16x32xf32> to vector<16x32xbf16>
    %c0_1 = arith.constant 0 : index
    %c0_2 = arith.constant 0 : index
    %2 = vector.load %arg3[%c0_1, %c0_2] : memref<32x96xbf16, #tpu.memory_space<vmem>>, vector<32x96xbf16>
    %cst = arith.constant dense<0.000000e+00> : vector<16x96xf32>
    %3 = tpu.matmul %1, %2, %cst {dimension_numbers = #tpu.dot_dimension_numbers<[1], [0], [0], [1], [0, 0, 1, 1], [], []>} : vector<16x32xbf16>, vector<32x96xbf16>, vector<16x96xf32> -> vector<16x96xf32>
    %c0_3 = arith.constant 0 : index
    %c0_4 = arith.constant 0 : index
    %4 = vector.load %arg4[%c0_3, %c0_4] : memref<1x96xf32, #tpu.memory_space<vmem>>, vector<1x96xf32>
    %5 = vector.broadcast %4 : vector<1x96xf32> to vector<16x96xf32>
    %6 = arith.addf %3, %5 : vector<16x96xf32>
    %7 = arith.truncf %6 : vector<16x96xf32> to vector<16x96xbf16>
    %c0_5 = arith.constant 0 : index
    %c0_6 = arith.constant 0 : index
    %8 = vector.load %arg5[%c0_5, %c0_6] : memref<16x96xbf16, #tpu.memory_space<vmem>>, vector<16x96xbf16>
    tpu.vector_store %arg5[%c0_5, %c0_6], %7 {strides = array<i32>} : memref<16x96xbf16, #tpu.memory_space<vmem>>, vector<16x96xbf16>,
    return
  }
  func.func @transform_0(%arg0: i32, %arg1: i32) -> (i32, i32) {
    %c0_i32 = arith.constant 0 : i32
    %c0_i32_0 = arith.constant 0 : i32
    return %arg0, %c0_i32 : i32, i32
  }
  func.func @transform_1(%arg0: i32, %arg1: i32) -> (i32, i32) {
    %c0_i32 = arith.constant 0 : i32
    %c0_i32_0 = arith.constant 0 : i32
    return %c0_i32, %arg1 : i32, i32
  }
  func.func @transform_2(%arg0: i32, %arg1: i32) -> (i32, i32) {
    %c0_i32 = arith.constant 0 : i32
    %c0_i32_0 = arith.constant 0 : i32
    return %c0_i32, %arg1 : i32, i32
  }
  func.func @transform_3(%arg0: i32, %arg1: i32) -> (i32, i32) {
    %c0_i32 = arith.constant 0 : i32
    return %arg0, %arg1 : i32, i32
  }
}

</mosaic_0001>

<llo_original>
// kernel: tpu_custom_call.1
$region0: #{tpu_custom_call.1}
  #allocation0 [shape = 'u32[]', space=smem, size = 0x4, offset = 0x4, fixed_abs, tag = 'smem constant byte address 0x4 - core index']
  #allocation1 [shape = 'u32[144,128]{1,0:T(1,128)}', space=vmem, size = 0x12000, scoped, tag = 'internal scratch']
  %s0 = inlined_call_operand.hbm [shape: f32[16,32], index: 0, kind: input, shape index: {}]
  %s1 = inlined_call_operand.hbm [shape: bf16[32,96], index: 1, kind: input, shape index: {}]
  %s2 = inlined_call_operand.hbm [shape: f32[1,96], index: 2, kind: input, shape index: {}]
  %s3 = inlined_call_operand.hbm [shape: bf16[16,96], index: 3, kind: output, shape index: {}]
  %s4 = sld [smem:[#allocation0]]
  $region34: #{tpu_custom_call.1} parent=0
    _
  %s6 = ssub.s32 1, %s4
  %s7 = scalar_select 0, %s6, %s4
  $region1: #{tpu_custom_call.1} parent=0
    #allocation2 [shape = 'u8[8192]{0}', space=vmem, size = 0x2000, scoped, tag = 'input window, operand 0, single buffered']
    #allocation3 [shape = 's32[1]{0}', space=sflag, size = 0x4, scoped, tag = 'scoped memory for tpu_custom_call.1']
    #allocation4 [shape = 's32[1]{0}', space=sflag, size = 0x4, scoped, tag = 'scoped memory for tpu_custom_call.1']
    #allocation5 [shape = 'u8[8192]{0}', space=vmem, size = 0x2000, scoped, tag = 'input window, operand 1, single buffered']
    #allocation6 [shape = 's32[1]{0}', space=sflag, size = 0x4, scoped, tag = 'scoped memory for tpu_custom_call.1']
    #allocation7 [shape = 'u8[512]{0}', space=vmem, size = 0x400, scoped, tag = 'input window, operand 2, single buffered']
    #allocation8 [shape = 'u8[4096]{0}', space=vmem, size = 0x1000, scoped, tag = 'output window, operand 0, single buffered']
    %8 = vsyncpa [#allocation3], 0
    %9 = vsyncpa [#allocation6], 0
    %10 = vsyncpa [#allocation4], 0
    // Predicated region
    $region2: #{tpu_custom_call.1} parent=1 // pred_check
      _
    $region3: #{tpu_custom_call.1} parent=1 // pred_check_branch
      %12 = sbr.rel (0) target = $region5
    $region4: #{tpu_custom_call.1} parent=1 // pred_region
      %s14 = ssub.s32 256, 256
      %15 = vsyncadd [#allocation3], %s14
      %s16 = sshll.u32 [#allocation2], 4
      %s17 = int_to_ptr.vmem [resolvable:$true] %s16
      %22 = dma.hbm_to_vmem [thread:$0]  %s0, 256, %s17, [#allocation3], 128, 128, 8
    $region5: #{tpu_custom_call.1} parent=1 // pred_fallthru
      _
    // Predicated region
    $region6: #{tpu_custom_call.1} parent=1 // pred_check
      _
    $region7: #{tpu_custom_call.1} parent=1 // pred_check_branch
      %24 = sbr.rel (0) target = $region9
    $region8: #{tpu_custom_call.1} parent=1 // pred_region
      %s26 = ssub.s32 256, 256
      %27 = vsyncadd [#allocation6], %s26
      %s28 = sshll.u32 [#allocation5], 4
      %s29 = int_to_ptr.vmem [resolvable:$true] %s28
      %34 = dma.hbm_to_vmem [thread:$0]  %s1, 256, %s29, [#allocation6], 64, 64, 4
    $region9: #{tpu_custom_call.1} parent=1 // pred_fallthru
      _
    // Predicated region
    $region10: #{tpu_custom_call.1} parent=1 // pred_check
      _
    $region11: #{tpu_custom_call.1} parent=1 // pred_check_branch
      %36 = sbr.rel (0) target = $region13
    $region12: #{tpu_custom_call.1} parent=1 // pred_region
      %s38 = ssub.s32 16, 16
      %39 = vsyncadd [#allocation6], %s38
      %s41 = sshll.u32 [#allocation7], 4
      %s42 = int_to_ptr.vmem [resolvable:$true] %s41
      %44 = dma.hbm_to_vmem [thread:$0]  %s2, 16, %s42, [#allocation6]
    $region13: #{tpu_custom_call.1} parent=1 // pred_fallthru
      _
    // Predicated region
    $region14: #{tpu_custom_call.1} parent=1 // pred_check
      _
    $region15: #{tpu_custom_call.1} parent=1 // pred_check_branch
      %46 = sbr.rel (0) target = $region17
    $region16: #{tpu_custom_call.1} parent=1 // pred_region
      %47 = dma.done [#allocation3], 256
    $region17: #{tpu_custom_call.1} parent=1 // pred_fallthru
      _
    // Predicated region
    $region18: #{tpu_custom_call.1} parent=1 // pred_check
      _
    $region19: #{tpu_custom_call.1} parent=1 // pred_check_branch
      %49 = sbr.rel (0) target = $region21
    $region20: #{tpu_custom_call.1} parent=1 // pred_region
      %50 = dma.done [#allocation6], 256
    $region21: #{tpu_custom_call.1} parent=1 // pred_fallthru
      _
    // Predicated region
    $region22: #{tpu_custom_call.1} parent=1 // pred_check
      _
    $region23: #{tpu_custom_call.1} parent=1 // pred_check_branch
      %52 = sbr.rel (0) target = $region25
    $region24: #{tpu_custom_call.1} parent=1 // pred_region
      %53 = dma.done [#allocation6], 16
    $region25: #{tpu_custom_call.1} parent=1 // pred_fallthru
      _
    %v55 = vld [vmem:[#allocation2] sm:$0xff]
    %v56 = vld [vmem:[#allocation2 + $0x8] sm:$0xff]
    %v57 = vpack.c.bf16 %v56, %v55
    %v58 = vld [vmem:[#allocation5] sm:$0xf]
    %v59 = vld [vmem:[#allocation5 + $0x4] sm:$0xf]
    %v60 = vld [vmem:[#allocation5 + $0x8] sm:$0xf]
    %v61 = vld [vmem:[#allocation5 + $0xc] sm:$0xf]
    %v62 = vld [vmem:[#allocation7] sm:$0x1]
    %v64 = vlaneseq
    %v65 = vshrl.u32 %v64, 7
    %v66 = vsub.s32 0, %v65
    %v67 = vrot.slane %v62, %v66
    %v73 = vunpack.c.l.b16 %v58
    %v74 = vunpack.c.l.b16 %v59
    %v75 = vunpack.c.l.b16 %v60
    %v76 = vunpack.c.l.b16 %v61
    %v77 = vpack.c.b16 %v74, %v73
    %v78 = vpack.c.b16 %v76, %v75
    %vm81 = vcmask 261120
    %v83 = vsel %vm81, %v57, 0
    %85 = vmatprep.subr.bf16.mxu0 0
    %86 = vmatpush1.bf16.msra.mxu0 %v77
    %87 = vmatprep.subr.bf16.mxu0 0
    %88 = vmatpush1.bf16.msra.mxu0 %v78
    %89 = vmatprep.subr.bf16.mxu0 0
    %90 = vmatpush1.bf16.msra.mxu0 0
    %91 = vmatprep.subr.bf16.mxu0 0
    %92 = vmatpush1.bf16.msra.mxu0 0
    %93 = vmatprep.subr.bf16.mxu0 0
    %94 = vmatpush1.bf16.msra.mxu0 0
    %95 = vmatprep.subr.bf16.mxu0 0
    %96 = vmatpush1.bf16.msra.mxu0 0
    %97 = vmatprep.subr.bf16.mxu0 0
    %98 = vmatpush1.bf16.msra.mxu0 0
    %99 = vmatprep.subr.bf16.mxu0 0
    %100 = vmatpush1.bf16.msra.mxu0 0
    %101 = vmatprep.subr.bf16.mxu0 0
    %102 = vmatpush1.bf16.msra.mxu0 0
    %103 = vmatprep.subr.bf16.mxu0 0
    %104 = vmatpush1.bf16.msra.mxu0 0
    %105 = vmatprep.subr.bf16.mxu0 0
    %106 = vmatpush1.bf16.msra.mxu0 0
    %107 = vmatprep.subr.bf16.mxu0 0
    %108 = vmatpush1.bf16.msra.mxu0 0
    %109 = vmatprep.subr.bf16.mxu0 0
    %110 = vmatpush1.bf16.msra.mxu0 0
    %111 = vmatprep.subr.bf16.mxu0 0
    %112 = vmatpush1.bf16.msra.mxu0 0
    %113 = vmatprep.subr.bf16.mxu0 0
    %114 = vmatpush1.bf16.msra.mxu0 0
    %115 = vmatprep.subr.bf16.mxu0 0
    %116 = vmatpush1.bf16.msra.mxu0 0
    %117 = vmatprep.mubr.bf16.mxu0 0
    %118 = vmatmul.mubr.bf16.gmra.mrb[0].mxu0 %v83
    %v119 = vpop.f32.mrb[0].mxu0
    %v120 = vadd.f32 %v67, %v119
    %v121 = vpop.f32.mrb[0].mxu0
    %v122 = vpop.f32.mrb[0].mxu0
    %v123 = vadd.f32 %v67, %v122
    %v124 = vpop.f32.mrb[0].mxu0
    %125 = vdwg.mxu0
    %v126 = vpack.c.bf16 %v123, %v120
    %v128 = vunpack.c.l.b16 %v126
    %v129 = vunpack.c.h.b16 %v126
    %v130 = vpack.c.b16 %v128, %v128
    %v131 = vpack.c.b16 %v129, %v129
    %vm134 = vcmask 781312
    %135 = vst.msk [vmem:[#allocation8] sm:$0xf] %vm134, %v130
    %136 = vst.msk [vmem:[#allocation8 + $0x4] sm:$0xf] %vm134, %v131
    // Predicated region
    $region26: #{tpu_custom_call.1} parent=1 // pred_check
      _
    $region27: #{tpu_custom_call.1} parent=1 // pred_check_branch
      %138 = sbr.rel (0) target = $region29
    $region28: #{tpu_custom_call.1} parent=1 // pred_region
      %s140 = ssub.s32 128, 128
      %141 = vsyncadd [#allocation4], %s140
      %s142 = sshll.u32 [#allocation8], 4
      %s143 = int_to_ptr.vmem [resolvable:$true] %s142
      %148 = dma.vmem_to_hbm [thread:$0]  %s143, 128, %s3, [#allocation4], 64, 64, 4
    $region29: #{tpu_custom_call.1} parent=1 // pred_fallthru
      _
    // Predicated region
    $region30: #{tpu_custom_call.1} parent=1 // pred_check
      _
    $region31: #{tpu_custom_call.1} parent=1 // pred_check_branch
      %150 = sbr.rel (0) target = $region33
    $region32: #{tpu_custom_call.1} parent=1 // pred_region
      %151 = dma.done [#allocation4], 128
    $region33: #{tpu_custom_call.1} parent=1 // pred_fallthru
      _
    %152 = vsyncpa [#allocation3], 1
    %153 = vsyncpa [#allocation6], 1
    %154 = vsyncpa [#allocation4], 1

</llo_original>
